<compile_context>
chip_gen: v7x
topology: tpu7x:2x2x1
jax: 0.10.0
libtpu: 0.0.40
codegen_flags: <defaults>
</compile_context>

<pallas_src>
import functools

import jax
import jax.numpy as jnp
from jax.experimental import pallas as pl
from jax.experimental.pallas import tpu as pltpu


# ---------------------------------------------------------------------------
# Generation-dependent tuning.
# ---------------------------------------------------------------------------
def _tpu_generation():
    """Best-effort TPU generation from device_kind ('TPU v6 lite' -> 6)."""
    try:
        kind = jax.devices()[0].device_kind.lower()
    except Exception:
        return None
    for g in (7, 6, 5, 4, 3, 2):
        if f"v{g}" in kind:
            return g
    return None


def _default_transcendental_dtype(gen):
    # v6e / v7x have a native bf16 EUP path (exp/log); v5e and older do not,
    # so bf16 there only adds cast traffic.
    if gen is not None and gen >= 6:
        return jnp.bfloat16
    return jnp.float32


def _vmem_tuning(gen):
    """Returns (target input-tile bytes per buffer, vmem_limit_bytes)."""
    if gen == 7:
        return 2 * 1024 * 1024, 32 * 1024 * 1024      # 64 MiB physical / TC
    if gen in (5, 6):
        return 8 * 1024 * 1024, 64 * 1024 * 1024      # 128 MiB physical
    return 4 * 1024 * 1024, 32 * 1024 * 1024          # unknown: conservative


def _round_up(n, m):
    return ((n + m - 1) // m) * m


def _lane_fill(n):
    return n / float(_round_up(n, 128))


# ---------------------------------------------------------------------------
# Kernels.
# ---------------------------------------------------------------------------
def _gem_kernel_rows(p_ref, x_ref, o_ref, *, eps, inner_dtype):
    """Layout A.  p_ref: SMEM (1,) f32;  x_ref: (TR, HW);  o_ref: (TR, 1)."""
    p = p_ref[0]                      # read once; scalar unit
    inv_p = 1.0 / p
    x = x_ref[...]
    # clamp in the input dtype (no round-trip casts), then run the whole
    # per-element transcendental chain (log -> mul -> exp) in inner_dtype.
    xc = jnp.maximum(x, jnp.asarray(eps, x.dtype)).astype(inner_dtype)
    xp = jnp.exp(jnp.log(xc) * p.astype(inner_dtype)).astype(jnp.float32)
    mean = jnp.mean(xp, axis=-1, keepdims=True)        # f32 lane reduction
    o_ref[...] = jnp.exp(jnp.log(mean) * inv_p).astype(o_ref.dtype)


def _gem_kernel_channels_last(p_ref, x_ref, o_ref, *, eps, inner_dtype):
    """Layout B.  p_ref: SMEM (1,) f32;  x_ref: (TN, HW, C);  o_ref: (TN, C)."""
    p = p_ref[0]
    inv_p = 1.0 / p
    x = x_ref[...]
    xc = jnp.maximum(x, jnp.asarray(eps, x.dtype)).astype(inner_dtype)
    xp = jnp.exp(jnp.log(xc) * p.astype(inner_dtype)).astype(jnp.float32)
    mean = jnp.mean(xp, axis=1)                        # f32 sublane reduction
    o_ref[...] = jnp.exp(jnp.log(mean) * inv_p).astype(o_ref.dtype)


# ---------------------------------------------------------------------------
# Wrapper.
# ---------------------------------------------------------------------------
def gem_pallas(x, p, eps=1e-6, *, transcendental_dtype=None):
    """x: (N, C, H, W); p: (1,) float32. Returns (N, C, 1, 1), matching
    F.avg_pool2d(x.clamp(min=eps).pow(p), (H, W)).pow(1/p)."""
    N, C, H, W = x.shape
    HW, NC = H * W, N * C

    gen = _tpu_generation()
    if transcendental_dtype is None:
        transcendental_dtype = _default_transcendental_dtype(gen)
    target_tile_bytes, vmem_limit = _vmem_tuning(gen)

    itemsize = jnp.dtype(x.dtype).itemsize
    align = 16 if itemsize == 2 else 8                 # bf16 packs 16 sublanes

    cost = pl.CostEstimate(
        flops=3 * NC * HW,
        transcendentals=2 * NC * HW + 2 * NC,
        bytes_accessed=NC * HW * itemsize + NC * itemsize,
    )
    compiler_params = pltpu.CompilerParams(
        dimension_semantics=("parallel",),             # shard tiles across TCs (v7x)
        vmem_limit_bytes=vmem_limit,
    )

    # Layout choice: put whichever axis fills the 128-lane vreg better on the
    # lane (last) axis.
    use_channels_last = _lane_fill(C) > _lane_fill(HW)

    n_tile = None
    if use_channels_last:
        bytes_per_image = _round_up(HW, 8) * _round_up(C, 128) * itemsize
        tn = max(1, target_tile_bytes // bytes_per_image)
        if N <= tn:
            n_tile = N                                 # full-dim block: always legal
        elif tn >= align:
            n_tile = (tn // align) * align             # multiple of 8/16: legal
        else:
            use_channels_last = False                  # single image too big: stream rows

    if use_channels_last:
        # ---- layout B: lanes = C, sublanes = H*W ---------------------------
        xt = jnp.transpose(x.reshape(N, C, HW), (0, 2, 1))   # (N, HW, C)
        grid = (pl.cdiv(N, n_tile),)
        out = pl.pallas_call(
            functools.partial(_gem_kernel_channels_last, eps=eps,
                              inner_dtype=transcendental_dtype),
            out_shape=jax.ShapeDtypeStruct((N, C), x.dtype),
            grid=grid,
            in_specs=[
                pl.BlockSpec(memory_space=pltpu.MemorySpace.SMEM),      # p
                pl.BlockSpec((n_tile, HW, C), lambda i: (i, 0, 0)),
            ],
            out_specs=pl.BlockSpec((n_tile, C), lambda i: (i, 0)),      # lane-dense
            compiler_params=compiler_params,
            cost_estimate=cost,
        )(p, xt)
        return out.reshape(N, C, 1, 1)

    # ---- layout A: rows = N*C, lanes = H*W ---------------------------------
    x2 = x.reshape(NC, HW)
    bytes_per_row = _round_up(HW, 128) * itemsize
    tr = max(align, target_tile_bytes // bytes_per_row)
    tr = max(align, (tr // align) * align)
    row_tile = int(min(tr, _round_up(NC, align)))
    grid = (pl.cdiv(NC, row_tile),)

    out = pl.pallas_call(
        functools.partial(_gem_kernel_rows, eps=eps,
                          inner_dtype=transcendental_dtype),
        out_shape=jax.ShapeDtypeStruct((NC, 1), x.dtype),
        grid=grid,
        in_specs=[
            pl.BlockSpec(memory_space=pltpu.MemorySpace.SMEM),          # p
            pl.BlockSpec((row_tile, HW), lambda i: (i, 0)),
        ],
        out_specs=pl.BlockSpec((row_tile, 1), lambda i: (i, 0)),
        compiler_params=compiler_params,
        cost_estimate=cost,
    )(p, x2)
    return out.reshape(N, C, 1, 1)


# ---------------------------------------------------------------------------
# Reference (pure JAX) and self-test.
# ---------------------------------------------------------------------------
def gem_reference(x, p, eps=1e-6):
    xc = jnp.maximum(x, eps)
    pooled = jnp.mean(xc ** p[0], axis=(-2, -1), keepdims=True)
    return pooled ** (1.0 / p[0])


if __name__ == "__main__":
    key = jax.random.PRNGKey(0)
    k1, k2 = jax.random.split(key)

    # Deterministic parameter init, mirroring GeM.__init__: p = ones(1) * 3.
    p = jnp.ones((1,), dtype=jnp.float32) * 3.0

    def run_and_check(x, rtol, atol, **kw):
        y = jax.block_until_ready(gem_pallas(x, p, eps=1e-6, **kw))
        y_ref = gem_reference(x, p, eps=1e-6)
        assert y.shape == y_ref.shape, (y.shape, y_ref.shape)
        assert jnp.allclose(y, y_ref, rtol=rtol, atol=atol), \
            f"mismatch vs reference (max abs err {float(jnp.max(jnp.abs(y - y_ref)))})"
        return y

    # Primary shape (NCHW conv feature map); H*W = 256 -> spatial-on-lanes layout.
    x1 = jax.random.uniform(k1, (2, 4, 16, 16), dtype=jnp.float32)

    # Strict check on the f32 transcendental path.
    run_and_check(x1, 1e-4, 1e-5, transcendental_dtype=jnp.float32)

    # Default (generation-tuned) path: bf16 EUP on v6e/v7x, f32 elsewhere.
    auto_bf16 = jnp.dtype(_default_transcendental_dtype(_tpu_generation())) == jnp.dtype(jnp.bfloat16)
    rtol, atol = (5e-2, 1e-3) if auto_bf16 else (1e-4, 1e-5)
    run_and_check(x1, rtol, atol)

    # Small-spatial CNN-head shape -> channels-last (lane-dense) layout.
    x2 = jax.random.uniform(k2, (2, 256, 7, 7), dtype=jnp.float32)
    run_and_check(x2, rtol, atol)

    print("KERNEL_OK")
</pallas_src>

<mosaic_0001>
module attributes {stable_mosaic.version = 11 : i64} {
  func.func @_gem_kernel_rows(%arg0: i32, %arg1: memref<1xf32, #tpu.memory_space<smem>>, %arg2: memref<8x256xf32, #tpu.memory_space<vmem>>, %arg3: memref<8x1xf32, #tpu.memory_space<vmem>>) attributes {dimension_semantics = [#tpu.dimension_semantics<parallel>], iteration_bounds = array<i64: 1>, scalar_prefetch = 0 : i64, scratch_operands = 0 : i64, tpu.core_type = #tpu.core_type<tc>, window_params = [{transform_indices = @transform_0, window_bounds = array<i64: 1>}, {transform_indices = @transform_1, window_bounds = array<i64: 8, 256>}, {transform_indices = @transform_2, window_bounds = array<i64: 8, 1>}]} {
    %c0 = arith.constant 0 : index
    %0 = memref.load %arg1[%c0] : memref<1xf32, #tpu.memory_space<smem>>
    %cst = arith.constant 1.000000e+00 : f32
    %1 = arith.divf %cst, %0 : f32
    %c0_0 = arith.constant 0 : index
    %c0_1 = arith.constant 0 : index
    %2 = vector.load %arg2[%c0_0, %c0_1] : memref<8x256xf32, #tpu.memory_space<vmem>>, vector<8x256xf32>
    %cst_2 = arith.constant 9.99999997E-7 : f32
    %3 = vector.broadcast %cst_2 : f32 to vector<8x256xf32>
    %4 = arith.maximumf %2, %3 : vector<8x256xf32>
    %5 = math.log %4 : vector<8x256xf32>
    %6 = vector.broadcast %0 : f32 to vector<8x256xf32>
    %7 = arith.mulf %5, %6 : vector<8x256xf32>
    %8 = math.exp %7 : vector<8x256xf32>
    %cst_3 = arith.constant dense<0.000000e+00> : vector<8xf32>
    %9 = vector.multi_reduction <add>, %8, %cst_3 [1] : vector<8x256xf32> to vector<8xf32>
    %10 = vector.shape_cast %9 : vector<8xf32> to vector<8x1xf32>
    %cst_4 = arith.constant 2.560000e+02 : f32
    %11 = vector.broadcast %cst_4 : f32 to vector<8x1xf32>
    %12 = arith.divf %10, %11 : vector<8x1xf32>
    %13 = math.log %12 : vector<8x1xf32>
    %14 = vector.broadcast %1 : f32 to vector<8x1xf32>
    %15 = arith.mulf %13, %14 : vector<8x1xf32>
    %16 = math.exp %15 : vector<8x1xf32>
    %c0_5 = arith.constant 0 : index
    %c0_6 = arith.constant 0 : index
    %17 = vector.load %arg3[%c0_5, %c0_6] : memref<8x1xf32, #tpu.memory_space<vmem>>, vector<8x1xf32>
    tpu.vector_store %arg3[%c0_5, %c0_6], %16 {strides = array<i32>} : memref<8x1xf32, #tpu.memory_space<vmem>>, vector<8x1xf32>,
    return
  }
  func.func @transform_0(%arg0: i32) -> i32 {
    %c0_i32 = arith.constant 0 : i32
    %c0_i32_0 = arith.constant 0 : i32
    return %c0_i32 : i32
  }
  func.func @transform_1(%arg0: i32) -> (i32, i32) {
    %c0_i32 = arith.constant 0 : i32
    %c0_i32_0 = arith.constant 0 : i32
    return %arg0, %c0_i32 : i32, i32
  }
  func.func @transform_2(%arg0: i32) -> (i32, i32) {
    %c0_i32 = arith.constant 0 : i32
    %c0_i32_0 = arith.constant 0 : i32
    return %arg0, %c0_i32 : i32, i32
  }
}

</mosaic_0001>

<llo_original>
// kernel: tpu_custom_call.1
$region0: #{tpu_custom_call.1}
  #allocation0 [shape = 'u32[]', space=smem, size = 0x4, offset = 0x4, fixed_abs, tag = 'smem constant byte address 0x4 - core index']
  #allocation1 [shape = 'u32[144,128]{1,0:T(1,128)}', space=vmem, size = 0x12000, scoped, tag = 'internal scratch']
  #allocation2 [shape = 'f32[1]{0:T(128)S(6)}', space=smem, size = 0x200, scoped, tag = 'scoped memory for tpu_custom_call.1']
  %s0 = inlined_call_operand.<no memory space> [shape: f32[1], index: 0, kind: input, shape index: {}]
  %s1 = inlined_call_operand.hbm [shape: f32[8,256], index: 1, kind: input, shape index: {}]
  %s2 = inlined_call_operand.vmem [shape: f32[8,1], index: 2, kind: output, shape index: {}]
  %s3 = sld [smem:[#allocation0]]
  $region22: #{tpu_custom_call.1} parent=0
    _
  %s5 = ssub.s32 1, %s3
  %s6 = scalar_select 0, %s5, %s3
  %7 = sst [smem:[#allocation2]] %s0
  $region1: #{tpu_custom_call.1} parent=0
    #allocation3 [shape = 'u8[8192]{0}', space=vmem, size = 0x2000, scoped, tag = 'input window, operand 1, single buffered']
    #allocation4 [shape = 's32[1]{0}', space=sflag, size = 0x4, scoped, tag = 'scoped memory for tpu_custom_call.1']
    %8 = vsyncpa [#allocation4], 0
    // Predicated region
    $region2: #{tpu_custom_call.1} parent=1 // pred_check
      _
    $region3: #{tpu_custom_call.1} parent=1 // pred_check_branch
      %10 = sbr.rel (0) target = $region5
    $region4: #{tpu_custom_call.1} parent=1 // pred_region
      _
    $region5: #{tpu_custom_call.1} parent=1 // pred_fallthru
      _
    // Predicated region
    $region6: #{tpu_custom_call.1} parent=1 // pred_check
      _
    $region7: #{tpu_custom_call.1} parent=1 // pred_check_branch
      %12 = sbr.rel (0) target = $region9
    $region8: #{tpu_custom_call.1} parent=1 // pred_region
      %s14 = ssub.s32 256, 256
      %15 = vsyncadd [#allocation4], %s14
      %s17 = sshll.u32 [#allocation3], 4
      %s18 = int_to_ptr.vmem [resolvable:$true] %s17
      %20 = dma.hbm_to_vmem [thread:$0]  %s1, 256, %s18, [#allocation4]
    $region9: #{tpu_custom_call.1} parent=1 // pred_fallthru
      _
    // Predicated region
    $region10: #{tpu_custom_call.1} parent=1 // pred_check
      _
    $region11: #{tpu_custom_call.1} parent=1 // pred_check_branch
      %22 = sbr.rel (0) target = $region13
    $region12: #{tpu_custom_call.1} parent=1 // pred_region
      %23 = dma.done [#allocation4], 256
    $region13: #{tpu_custom_call.1} parent=1 // pred_fallthru
      _
    %s24 = sld [smem:[#allocation2]]
    %v25 = vstv %s24
    %v26 = vrcp.pop %v25
    %s27 = vtos %v26
    %v28 = vld [vmem:[#allocation3] sm:$0xff]
    %v29 = vld [vmem:[#allocation3 + $0x8] sm:$0xff]
    %v30 = vmax.f32 %v28, 1e-06
    %v31 = vmax.f32 %v29, 1e-06
    %v32 = vlog2.pop %v30
    %v33 = vmul.f32 %v32, 0.6931472
    %v34 = vlog2.pop %v31
    %v35 = vmul.f32 %v34, 0.6931472
    %v36 = vstv %s24
    %v37 = vmul.f32 %v33, %v36
    %v38 = vmul.f32 %v35, %v36
    %v39 = vmul.f32 %v37, 1.442695
    %v40 = vpow.pop %v39
    %v41 = vmul.f32 %v38, 1.442695
    %v42 = vpow.pop %v41
    %v43 = vadd.f32 %v40, %v42
    %44 = vadd.xlane.f32.xlu0 %v43
    %v45 = vpop.xlane.xlu0 %44
    %v46 = vrcp.pop 256.0
    %v47 = vmul.f32 %v45, %v46
    %v48 = vlog2.pop %v47
    %v49 = vmul.f32 %v48, 0.6931472
    %v50 = vstv %s27
    %v51 = vmul.f32 %v49, %v50
    %v52 = vmul.f32 %v51, 1.442695
    %v53 = vpow.pop %v52
    %vm54 = vcmask 7168
    %55 = vst.msk [vmem:[%s2] sm:$0xff] %vm54, %v53
    // Predicated region
    $region14: #{tpu_custom_call.1} parent=1 // pred_check
      _
    $region15: #{tpu_custom_call.1} parent=1 // pred_check_branch
      %57 = sbr.rel (0) target = $region17
    $region16: #{tpu_custom_call.1} parent=1 // pred_region
      _
    $region17: #{tpu_custom_call.1} parent=1 // pred_fallthru
      _
    // Predicated region
    $region18: #{tpu_custom_call.1} parent=1 // pred_check
      _
    $region19: #{tpu_custom_call.1} parent=1 // pred_check_branch
      %59 = sbr.rel (0) target = $region21
    $region20: #{tpu_custom_call.1} parent=1 // pred_region
      _
    $region21: #{tpu_custom_call.1} parent=1 // pred_fallthru
      _
    %60 = vsyncpa [#allocation4], 1

</llo_original>
